<compile_context>
chip_gen: v5e
topology: v5e:2x2
jax: 0.10.0
libtpu: 0.0.40
codegen_flags: <defaults>
</compile_context>

<pallas_src>
import jax
import jax.numpy as jnp
from jax.experimental import pallas as pl
from jax.experimental.pallas import tpu as pltpu


_LANE = 128      # lane width (last dim) of a vreg
_SUBLANE = 8     # sublane width (second-to-last dim) of a vreg


def _round_up(n, m):
    return ((n + m - 1) // m) * m


def _cores_per_device():
    """Best-effort TensorCores-per-device count (2 on v7x, 1 on v5e/v6e)."""
    try:
        dev = jax.devices()[0]
        n = getattr(dev, "num_cores", None)
        if isinstance(n, int) and n > 0:
            return n
        kind = str(getattr(dev, "device_kind", "")).lower()
        if "v7" in kind:
            return 2
    except Exception:
        pass
    return 1


def _qnet_kernel(x_ref, w1_ref, b1_ref, w2_ref, b2_ref, o_ref):
    # layer 1: (tm, in) @ (in, hidden) on the MXU — bf16 inputs, f32 accumulate
    x = x_ref[...].astype(w1_ref.dtype)
    h = jnp.dot(x, w1_ref[...], preferred_element_type=jnp.float32)
    # bias + ReLU in f32 on the VPU (rides in spare VALU slots next to MXU pops)
    h = jnp.maximum(h + b1_ref[...], 0.0)
    # layer 2: (tm, hidden) @ (hidden, 128) — lane-dense 128-wide output store
    y = jnp.dot(h.astype(w2_ref.dtype), w2_ref[...],
                preferred_element_type=jnp.float32)
    o_ref[...] = (y + b2_ref[...]).astype(o_ref.dtype)


def prepare_qnet_params(w1, b1, w2, b2, compute_dtype=jnp.bfloat16,
                        out_dtype=jnp.bfloat16):
    """One-time conversion of PyTorch-layout params into kernel layout.

    w1: (hidden, in)  b1: (hidden,)  w2: (out, hidden)  b2: (out,)
    Returns a dict of kernel-ready arrays; do NOT rebuild this per call.
    """
    hidden, _in_f = w1.shape
    out_f = w2.shape[0]
    out_pad = _round_up(out_f, _LANE)

    w1_t = jnp.asarray(w1).T.astype(compute_dtype)             # (in, hidden)
    b1_r = jnp.asarray(b1).astype(jnp.float32)[None, :]        # (1, hidden)

    w2_t = jnp.zeros((hidden, out_pad), compute_dtype)          # (hidden, 128k)
    w2_t = w2_t.at[:, :out_f].set(jnp.asarray(w2).T.astype(compute_dtype))
    b2_r = jnp.zeros((1, out_pad), jnp.float32)                 # (1, 128k)
    b2_r = b2_r.at[:, :out_f].set(jnp.asarray(b2).astype(jnp.float32))

    return {"w1_t": w1_t, "b1": b1_r, "w2_t": w2_t, "b2": b2_r,
            "out_features": out_f, "out_dtype": out_dtype}


def linear_qnet_forward(x, params, n_tiles=None):
    """Fused 2-layer MLP forward.  x: (B, in_features) -> (B, out_features)."""
    w1_t, b1_r = params["w1_t"], params["b1"]
    w2_t, b2_r = params["w2_t"], params["b2"]
    out_f = params["out_features"]
    out_dtype = params["out_dtype"]

    squeeze = (x.ndim == 1)
    if squeeze:
        x = x[None, :]

    B, in_f = x.shape
    hidden = w1_t.shape[1]
    out_pad = w2_t.shape[1]

    if n_tiles is None:
        n_tiles = _cores_per_device()
    if B < 2 * _SUBLANE:      # tiny (inference) batches: never worth splitting
        n_tiles = 1

    if n_tiles == 1:
        # Whole batch as one block (block == full array bypasses the (8,128)
        # rule): no host-side pad, no row slice, grid collapses to (1,).
        tm, b_pad = B, B
    else:
        # Dual-TensorCore chips: exactly n_tiles parallel tiles, tm derived
        # from B so rounding waste is at most 7 rows per tile.
        tm = _round_up(pl.cdiv(B, n_tiles), _SUBLANE)
        b_pad = n_tiles * tm
        if b_pad != B:
            x = jnp.pad(x, ((0, b_pad - B), (0, 0)))

    out = pl.pallas_call(
        _qnet_kernel,
        out_shape=jax.ShapeDtypeStruct((b_pad, out_pad), out_dtype),
        grid=(b_pad // tm,),
        in_specs=[
            pl.BlockSpec((tm, in_f), lambda i: (i, 0)),          # x batch tile
            pl.BlockSpec((in_f, hidden), lambda i: (0, 0)),      # w1^T (resident)
            pl.BlockSpec((1, hidden), lambda i: (0, 0)),         # b1
            pl.BlockSpec((hidden, out_pad), lambda i: (0, 0)),   # w2^T (resident)
            pl.BlockSpec((1, out_pad), lambda i: (0, 0)),        # b2
        ],
        out_specs=pl.BlockSpec((tm, out_pad), lambda i: (i, 0)),
        compiler_params=pltpu.CompilerParams(
            dimension_semantics=("parallel",)),
    )(x, w1_t, b1_r, w2_t, b2_r)

    out = out[:B, :out_f] if b_pad != B else out[:, :out_f]
    return out[0] if squeeze else out


def init_linear_qnet_params(key, input_size, hidden_size, output_size,
                            dtype=jnp.float32):
    """Deterministic init mimicking torch.nn.Linear (uniform +/-1/sqrt(fan_in))."""
    k1, k2, k3, k4 = jax.random.split(key, 4)
    lim1 = 1.0 / (input_size ** 0.5)
    lim2 = 1.0 / (hidden_size ** 0.5)
    w1 = jax.random.uniform(k1, (hidden_size, input_size), dtype, -lim1, lim1)
    b1 = jax.random.uniform(k2, (hidden_size,), dtype, -lim1, lim1)
    w2 = jax.random.uniform(k3, (output_size, hidden_size), dtype, -lim2, lim2)
    b2 = jax.random.uniform(k4, (output_size,), dtype, -lim2, lim2)
    return w1, b1, w2, b2


# TODO(synk): Linear_QNet.save() is file I/O (torch.save) — no Pallas equivalent.


if __name__ == "__main__":
    # Shapes consistent with the snake Q-net usage: 11 state features,
    # 256 hidden units, 3 actions.
    input_size, hidden_size, output_size = 11, 256, 3

    key = jax.random.PRNGKey(0)
    kx, kp, kt = jax.random.split(key, 3)
    w1, b1, w2, b2 = init_linear_qnet_params(
        kp, input_size, hidden_size, output_size)

    # One-time parameter preparation (transpose / pad / cast) — not per call.
    params = prepare_qnet_params(w1, b1, w2, b2)

    def ref_fwd(xf):
        return jnp.maximum(xf @ w1.T + b1, 0.0) @ w2.T + b2

    # 1) Small inference batch — single-block path (no pad, no row slice).
    x_small = jax.random.normal(kx, (4, input_size), dtype=jnp.float32)
    out_small = jax.block_until_ready(linear_qnet_forward(x_small, params))
    assert out_small.shape == (4, output_size)
    assert jnp.allclose(out_small.astype(jnp.float32), ref_fwd(x_small),
                        atol=5e-2, rtol=5e-2), (
        f"max abs err {jnp.max(jnp.abs(out_small.astype(jnp.float32) - ref_fwd(x_small)))}")

    # 2) Training-style batch, forcing the 2-tile (dual-TensorCore) path with
    #    a batch size that needs padding — exercises the tiled/pad branch.
    x_train = jax.random.normal(kt, (300, input_size), dtype=jnp.float32)
    out_train = jax.block_until_ready(
        linear_qnet_forward(x_train, params, n_tiles=2))
    assert out_train.shape == (300, output_size)
    assert jnp.allclose(out_train.astype(jnp.float32), ref_fwd(x_train),
                        atol=5e-2, rtol=5e-2), (
        f"max abs err {jnp.max(jnp.abs(out_train.astype(jnp.float32) - ref_fwd(x_train)))}")

    print("KERNEL_OK")
</pallas_src>

<mosaic_0001>
module attributes {stable_mosaic.version = 11 : i64} {
  func.func @_qnet_kernel(%arg0: i32, %arg1: memref<4x11xf32, #tpu.memory_space<vmem>>, %arg2: memref<11x256xbf16, #tpu.memory_space<vmem>>, %arg3: memref<1x256xf32, #tpu.memory_space<vmem>>, %arg4: memref<256x128xbf16, #tpu.memory_space<vmem>>, %arg5: memref<1x128xf32, #tpu.memory_space<vmem>>, %arg6: memref<4x128xbf16, #tpu.memory_space<vmem>>) attributes {dimension_semantics = [#tpu.dimension_semantics<parallel>], iteration_bounds = array<i64: 1>, scalar_prefetch = 0 : i64, scratch_operands = 0 : i64, tpu.core_type = #tpu.core_type<tc>, window_params = [{transform_indices = @transform_0, window_bounds = array<i64: 4, 11>}, {pipeline_mode = #tpu.pipeline_mode<synchronous>, transform_indices = @transform_1, window_bounds = array<i64: 11, 256>}, {pipeline_mode = #tpu.pipeline_mode<synchronous>, transform_indices = @transform_2, window_bounds = array<i64: 1, 256>}, {pipeline_mode = #tpu.pipeline_mode<synchronous>, transform_indices = @transform_3, window_bounds = array<i64: 256, 128>}, {pipeline_mode = #tpu.pipeline_mode<synchronous>, transform_indices = @transform_4, window_bounds = array<i64: 1, 128>}, {transform_indices = @transform_5, window_bounds = array<i64: 4, 128>}]} {
    %c0 = arith.constant 0 : index
    %c0_0 = arith.constant 0 : index
    %0 = vector.load %arg1[%c0, %c0_0] : memref<4x11xf32, #tpu.memory_space<vmem>>, vector<4x11xf32>
    %1 = arith.truncf %0 : vector<4x11xf32> to vector<4x11xbf16>
    %c0_1 = arith.constant 0 : index
    %c0_2 = arith.constant 0 : index
    %2 = vector.load %arg2[%c0_1, %c0_2] : memref<11x256xbf16, #tpu.memory_space<vmem>>, vector<11x256xbf16>
    %cst = arith.constant dense<0.000000e+00> : vector<4x256xf32>
    %3 = tpu.matmul %1, %2, %cst {dimension_numbers = #tpu.dot_dimension_numbers<[1], [0], [0], [1], [0, 0, 1, 1], [], []>} : vector<4x11xbf16>, vector<11x256xbf16>, vector<4x256xf32> -> vector<4x256xf32>
    %c0_3 = arith.constant 0 : index
    %c0_4 = arith.constant 0 : index
    %4 = vector.load %arg3[%c0_3, %c0_4] : memref<1x256xf32, #tpu.memory_space<vmem>>, vector<1x256xf32>
    %5 = vector.broadcast %4 : vector<1x256xf32> to vector<4x256xf32>
    %6 = arith.addf %3, %5 : vector<4x256xf32>
    %cst_5 = arith.constant 0.000000e+00 : f32
    %7 = vector.broadcast %cst_5 : f32 to vector<4x256xf32>
    %8 = arith.maximumf %6, %7 : vector<4x256xf32>
    %9 = arith.truncf %8 : vector<4x256xf32> to vector<4x256xbf16>
    %c0_6 = arith.constant 0 : index
    %c0_7 = arith.constant 0 : index
    %10 = vector.load %arg4[%c0_6, %c0_7] : memref<256x128xbf16, #tpu.memory_space<vmem>>, vector<256x128xbf16>
    %cst_8 = arith.constant dense<0.000000e+00> : vector<4x128xf32>
    %11 = tpu.matmul %9, %10, %cst_8 {dimension_numbers = #tpu.dot_dimension_numbers<[1], [0], [0], [1], [0, 0, 1, 1], [], []>} : vector<4x256xbf16>, vector<256x128xbf16>, vector<4x128xf32> -> vector<4x128xf32>
    %c0_9 = arith.constant 0 : index
    %c0_10 = arith.constant 0 : index
    %12 = vector.load %arg5[%c0_9, %c0_10] : memref<1x128xf32, #tpu.memory_space<vmem>>, vector<1x128xf32>
    %13 = vector.broadcast %12 : vector<1x128xf32> to vector<4x128xf32>
    %14 = arith.addf %11, %13 : vector<4x128xf32>
    %15 = arith.truncf %14 : vector<4x128xf32> to vector<4x128xbf16>
    %c0_11 = arith.constant 0 : index
    %c0_12 = arith.constant 0 : index
    %16 = vector.load %arg6[%c0_11, %c0_12] : memref<4x128xbf16, #tpu.memory_space<vmem>>, vector<4x128xbf16>
    tpu.vector_store %arg6[%c0_11, %c0_12], %15 {strides = array<i32>} : memref<4x128xbf16, #tpu.memory_space<vmem>>, vector<4x128xbf16>,
    return
  }
  func.func @transform_0(%arg0: i32) -> (i32, i32) {
    %c0_i32 = arith.constant 0 : i32
    %c0_i32_0 = arith.constant 0 : i32
    return %arg0, %c0_i32 : i32, i32
  }
  func.func @transform_1(%arg0: i32) -> (i32, i32) {
    %c0_i32 = arith.constant 0 : i32
    %c0_i32_0 = arith.constant 0 : i32
    %c0_i32_1 = arith.constant 0 : i32
    return %c0_i32, %c0_i32_0 : i32, i32
  }
  func.func @transform_2(%arg0: i32) -> (i32, i32) {
    %c0_i32 = arith.constant 0 : i32
    %c0_i32_0 = arith.constant 0 : i32
    %c0_i32_1 = arith.constant 0 : i32
    return %c0_i32, %c0_i32_0 : i32, i32
  }
  func.func @transform_3(%arg0: i32) -> (i32, i32) {
    %c0_i32 = arith.constant 0 : i32
    %c0_i32_0 = arith.constant 0 : i32
    %c0_i32_1 = arith.constant 0 : i32
    return %c0_i32, %c0_i32_0 : i32, i32
  }
  func.func @transform_4(%arg0: i32) -> (i32, i32) {
    %c0_i32 = arith.constant 0 : i32
    %c0_i32_0 = arith.constant 0 : i32
    %c0_i32_1 = arith.constant 0 : i32
    return %c0_i32, %c0_i32_0 : i32, i32
  }
  func.func @transform_5(%arg0: i32) -> (i32, i32) {
    %c0_i32 = arith.constant 0 : i32
    %c0_i32_0 = arith.constant 0 : i32
    return %arg0, %c0_i32 : i32, i32
  }
}

</mosaic_0001>

<llo_original>
// kernel: tpu_custom_call.1
$region0: #{tpu_custom_call.1}
  #allocation0 [shape = 'u32[]', space=smem, size = 0x4, offset = 0x4, fixed_abs, tag = 'smem constant byte address 0x4 - core index']
  #allocation1 [shape = 'u32[72,128]{1,0:T(1,128)}', space=vmem, size = 0x9000, scoped, tag = 'internal scratch']
  %s0 = inlined_call_operand.hbm [shape: f32[4,11], index: 0, kind: input, shape index: {}]
  %s1 = inlined_call_operand.hbm [shape: bf16[11,256], index: 1, kind: input, shape index: {}]
  %s2 = inlined_call_operand.hbm [shape: f32[1,256], index: 2, kind: input, shape index: {}]
  %s3 = inlined_call_operand.hbm [shape: bf16[256,128], index: 3, kind: input, shape index: {}]
  %s4 = inlined_call_operand.vmem [shape: f32[1,128], index: 4, kind: input, shape index: {}]
  %s5 = inlined_call_operand.hbm [shape: bf16[4,128], index: 5, kind: output, shape index: {}]
  %s6 = sld [smem:[#allocation0]]
  $region46: #{tpu_custom_call.1} parent=0
    _
  %s8 = ssub.s32 1, %s6
  %s9 = scalar_select 0, %s8, %s6
  $region1: #{tpu_custom_call.1} parent=0
    #allocation2 [shape = 'u8[2048]{0}', space=vmem, size = 0x800, scoped, tag = 'input window, operand 0, single buffered']
    #allocation3 [shape = 's32[1]{0}', space=sflag, size = 0x4, scoped, tag = 'scoped memory for tpu_custom_call.1']
    #allocation4 [shape = 's32[1]{0}', space=sflag, size = 0x4, scoped, tag = 'scoped memory for tpu_custom_call.1']
    #allocation5 [shape = 'u8[8192]{0}', space=vmem, size = 0x2000, scoped, tag = 'input window, operand 1, single buffered']
    #allocation6 [shape = 's32[1]{0}', space=sflag, size = 0x4, scoped, tag = 'scoped memory for tpu_custom_call.1']
    #allocation7 [shape = 'u8[1024]{0}', space=vmem, size = 0x400, scoped, tag = 'input window, operand 2, single buffered']
    #allocation8 [shape = 'u8[65536]{0}', space=vmem, size = 0x10000, scoped, tag = 'input window, operand 3, single buffered']
    #allocation9 [shape = 's32[1]{0}', space=sflag, size = 0x4, scoped, tag = 'scoped memory for tpu_custom_call.1']
    #allocation10 [shape = 'u8[1024]{0}', space=vmem, size = 0x400, scoped, tag = 'output window, operand 0, single buffered']
    %10 = vsyncpa [#allocation3], 0
    %11 = vsyncpa [#allocation6], 0
    %12 = vsyncpa [#allocation9], 0
    %13 = vsyncpa [#allocation4], 0
    // Predicated region
    $region2: #{tpu_custom_call.1} parent=1 // pred_check
      _
    $region3: #{tpu_custom_call.1} parent=1 // pred_check_branch
      %15 = sbr.rel (0) target = $region5
    $region4: #{tpu_custom_call.1} parent=1 // pred_region
      %17 = vsyncadd [#allocation3], 0
      %s19 = sshll.u32 %s0, 4
      %s20 = int_to_ptr.hbm [resolvable:$true] %s19
      %s21 = sshll.u32 [#allocation2], 4
      %s22 = int_to_ptr.vmem [resolvable:$true] %s21
      %24 = dma.hbm_to_vmem [thread:$0]  %s20, 64, %s22, [#allocation3]
    $region5: #{tpu_custom_call.1} parent=1 // pred_fallthru
      _
    // Predicated region
    $region6: #{tpu_custom_call.1} parent=1 // pred_check
      _
    $region7: #{tpu_custom_call.1} parent=1 // pred_check_branch
      %26 = sbr.rel (0) target = $region9
    $region8: #{tpu_custom_call.1} parent=1 // pred_region
      %28 = vsyncadd [#allocation6], 0
      %s29 = sshll.u32 %s1, 4
      %s30 = int_to_ptr.hbm [resolvable:$true] %s29
      %s31 = sshll.u32 [#allocation5], 4
      %s32 = int_to_ptr.vmem [resolvable:$true] %s31
      %37 = dma.hbm_to_vmem [thread:$0]  %s30, 256, %s32, [#allocation6], 128, 128, 8
    $region9: #{tpu_custom_call.1} parent=1 // pred_fallthru
      _
    // Predicated region
    $region10: #{tpu_custom_call.1} parent=1 // pred_check
      _
    $region11: #{tpu_custom_call.1} parent=1 // pred_check_branch
      %39 = sbr.rel (0) target = $region13
    $region12: #{tpu_custom_call.1} parent=1 // pred_region
      %41 = vsyncadd [#allocation6], 0
      %s43 = sshll.u32 %s2, 4
      %s44 = int_to_ptr.hbm [resolvable:$true] %s43
      %s45 = sshll.u32 [#allocation7], 4
      %s46 = int_to_ptr.vmem [resolvable:$true] %s45
      %48 = dma.hbm_to_vmem [thread:$0]  %s44, 32, %s46, [#allocation6]
    $region13: #{tpu_custom_call.1} parent=1 // pred_fallthru
      _
    // Predicated region
    $region14: #{tpu_custom_call.1} parent=1 // pred_check
      _
    $region15: #{tpu_custom_call.1} parent=1 // pred_check_branch
      %50 = sbr.rel (0) target = $region17
    $region16: #{tpu_custom_call.1} parent=1 // pred_region
      %52 = vsyncadd [#allocation9], 0
      %s53 = sshll.u32 %s3, 4
      %s54 = int_to_ptr.hbm [resolvable:$true] %s53
      %s55 = sshll.u32 [#allocation8], 4
      %s56 = int_to_ptr.vmem [resolvable:$true] %s55
      %61 = dma.hbm_to_vmem [thread:$0]  %s54, 2048, %s56, [#allocation9], 64, 64, 4
    $region17: #{tpu_custom_call.1} parent=1 // pred_fallthru
      _
    // Predicated region
    $region18: #{tpu_custom_call.1} parent=1 // pred_check
      _
    $region19: #{tpu_custom_call.1} parent=1 // pred_check_branch
      %63 = sbr.rel (0) target = $region21
    $region20: #{tpu_custom_call.1} parent=1 // pred_region
      _
    $region21: #{tpu_custom_call.1} parent=1 // pred_fallthru
      _
    // Predicated region
    $region22: #{tpu_custom_call.1} parent=1 // pred_check
      _
    $region23: #{tpu_custom_call.1} parent=1 // pred_check_branch
      %65 = sbr.rel (0) target = $region25
    $region24: #{tpu_custom_call.1} parent=1 // pred_region
      %67 = dma.done [#allocation3], 64
    $region25: #{tpu_custom_call.1} parent=1 // pred_fallthru
      _
    // Predicated region
    $region26: #{tpu_custom_call.1} parent=1 // pred_check
      _
    $region27: #{tpu_custom_call.1} parent=1 // pred_check_branch
      %69 = sbr.rel (0) target = $region29
    $region28: #{tpu_custom_call.1} parent=1 // pred_region
      %71 = dma.done [#allocation6], 256
    $region29: #{tpu_custom_call.1} parent=1 // pred_fallthru
      _
    // Predicated region
    $region30: #{tpu_custom_call.1} parent=1 // pred_check
      _
    $region31: #{tpu_custom_call.1} parent=1 // pred_check_branch
      %73 = sbr.rel (0) target = $region33
    $region32: #{tpu_custom_call.1} parent=1 // pred_region
      %75 = dma.done [#allocation6], 32
    $region33: #{tpu_custom_call.1} parent=1 // pred_fallthru
      _
    // Predicated region
    $region34: #{tpu_custom_call.1} parent=1 // pred_check
      _
    $region35: #{tpu_custom_call.1} parent=1 // pred_check_branch
      %77 = sbr.rel (0) target = $region37
    $region36: #{tpu_custom_call.1} parent=1 // pred_region
      %79 = dma.done [#allocation9], 2048
    $region37: #{tpu_custom_call.1} parent=1 // pred_fallthru
      _
    %v81 = vld [vmem:[#allocation2] sm:$0xf]
    %v82 = vpack.c.bf16 %v81, %v81
    %v83 = vld [vmem:[#allocation5] sm:$0xff]
    %v84 = vld [vmem:[#allocation5 + $0x8] sm:$0x33]
    %v85 = vld [vmem:[#allocation7] sm:$0x3]
    %v87 = vperm.slane %v85, 0
    %v88 = vperm.slane %v85, 1
    %v93 = vunpack.c.l.b16 %v83
    %v94 = vunpack.c.h.b16 %v83
    %v95 = vunpack.c.l.b16 %v84
    %v96 = vunpack.c.h.b16 %v84
    %v97 = vpack.c.b16 %v95, %v93
    %v98 = vpack.c.b16 %v96, %v94
    %vm99 = vcmask 89088
    %v101 = vsel %vm99, %v82, 0
    %vm103 = vcmask 1044480
    %vm104 = vcmask 1045504
    %v105 = vsel %vm103, 4294967295, 65535
    %v106 = vsel %vm104, %v105, 0
    %v108 = vand.u32 %v97, %v106
    %v111 = vand.u32 %v98, %v106
    %113 = vmatpush.bf16.msra.mxu0 0
    %114 = vmatpush.bf16.msra.mxu0 0
    %115 = vmatpush.bf16.msra.mxu0 0
    %116 = vmatpush.bf16.msra.mxu0 0
    %117 = vmatpush.bf16.msra.mxu0 0
    %118 = vmatpush.bf16.msra.mxu0 0
    %119 = vmatpush.bf16.msra.mxu0 0
    %120 = vmatpush.bf16.msra.mxu0 %v108
    %121 = vmatmul.bf16.gmra.mxu0 %v101
    %v122 = vpop.f32.mrf.mxu0
    %v123 = vadd.f32 %v87, %v122
    %v124 = vpop.f32.mrf.mxu0
    %125 = vdwg.mxu0
    %126 = vmatpush.bf16.msra.mxu0 0
    %127 = vmatpush.bf16.msra.mxu0 0
    %128 = vmatpush.bf16.msra.mxu0 0
    %129 = vmatpush.bf16.msra.mxu0 0
    %130 = vmatpush.bf16.msra.mxu0 0
    %131 = vmatpush.bf16.msra.mxu0 0
    %132 = vmatpush.bf16.msra.mxu0 0
    %133 = vmatpush.bf16.msra.mxu0 %v111
    %134 = vmatmul.bf16.gmra.mxu0 %v101
    %v135 = vpop.f32.mrf.mxu0
    %v136 = vadd.f32 %v88, %v135
    %v137 = vpop.f32.mrf.mxu0
    %138 = vdwg.mxu0
    %v139 = vmax.f32 %v123, 0.0
    %v140 = vmax.f32 %v136, 0.0
    %v141 = vpack.c.bf16 %v139, %v139
    %v142 = vpack.c.bf16 %v140, %v140
    %v143 = vld [vmem:[#allocation8] sm:$0xf]
    %v144 = vld [vmem:[#allocation8 + $0x4] sm:$0xf]
    %v145 = vld [vmem:[#allocation8 + $0x8] sm:$0xf]
    %v146 = vld [vmem:[#allocation8 + $0xc] sm:$0xf]
    %v147 = vld [vmem:[#allocation8 + $0x10] sm:$0xf]
    %v148 = vld [vmem:[#allocation8 + $0x14] sm:$0xf]
    %v149 = vld [vmem:[#allocation8 + $0x18] sm:$0xf]
    %v150 = vld [vmem:[#allocation8 + $0x1c] sm:$0xf]
    %v151 = vld [vmem:[#allocation8 + $0x20] sm:$0xf]
    %v152 = vld [vmem:[#allocation8 + $0x24] sm:$0xf]
    %v153 = vld [vmem:[#allocation8 + $0x28] sm:$0xf]
    %v154 = vld [vmem:[#allocation8 + $0x2c] sm:$0xf]
    %v155 = vld [vmem:[#allocation8 + $0x30] sm:$0xf]
    %v156 = vld [vmem:[#allocation8 + $0x34] sm:$0xf]
    %v157 = vld [vmem:[#allocation8 + $0x38] sm:$0xf]
    %v158 = vld [vmem:[#allocation8 + $0x3c] sm:$0xf]
    %v159 = vld [vmem:[#allocation8 + $0x40] sm:$0xf]
    %v160 = vld [vmem:[#allocation8 + $0x44] sm:$0xf]
    %v161 = vld [vmem:[#allocation8 + $0x48] sm:$0xf]
    %v162 = vld [vmem:[#allocation8 + $0x4c] sm:$0xf]
    %v163 = vld [vmem:[#allocation8 + $0x50] sm:$0xf]
    %v164 = vld [vmem:[#allocation8 + $0x54] sm:$0xf]
    %v165 = vld [vmem:[#allocation8 + $0x58] sm:$0xf]
    %v166 = vld [vmem:[#allocation8 + $0x5c] sm:$0xf]
    %v167 = vld [vmem:[#allocation8 + $0x60] sm:$0xf]
    %v168 = vld [vmem:[#allocation8 + $0x64] sm:$0xf]
    %v169 = vld [vmem:[#allocation8 + $0x68] sm:$0xf]
    %v170 = vld [vmem:[#allocation8 + $0x6c] sm:$0xf]
    %v171 = vld [vmem:[#allocation8 + $0x70] sm:$0xf]
    %v172 = vld [vmem:[#allocation8 + $0x74] sm:$0xf]
    %v173 = vld [vmem:[#allocation8 + $0x78] sm:$0xf]
    %v174 = vld [vmem:[#allocation8 + $0x7c] sm:$0xf]
    %v175 = vld [vmem:[%s4] sm:$0x1]
    %v177 = vperm.slane %v175, 0
    %v211 = vunpack.c.l.b16 %v143
    %v212 = vunpack.c.l.b16 %v144
    %v213 = vunpack.c.l.b16 %v145
    %v214 = vunpack.c.l.b16 %v146
    %v215 = vunpack.c.l.b16 %v147
    %v216 = vunpack.c.l.b16 %v148
    %v217 = vunpack.c.l.b16 %v149
    %v218 = vunpack.c.l.b16 %v150
    %v219 = vunpack.c.l.b16 %v151
    %v220 = vunpack.c.l.b16 %v152
    %v221 = vunpack.c.l.b16 %v153
    %v222 = vunpack.c.l.b16 %v154
    %v223 = vunpack.c.l.b16 %v155
    %v224 = vunpack.c.l.b16 %v156
    %v225 = vunpack.c.l.b16 %v157
    %v226 = vunpack.c.l.b16 %v158
    %v227 = vunpack.c.l.b16 %v159
    %v228 = vunpack.c.l.b16 %v160
    %v229 = vunpack.c.l.b16 %v161
    %v230 = vunpack.c.l.b16 %v162
    %v231 = vunpack.c.l.b16 %v163
    %v232 = vunpack.c.l.b16 %v164
    %v233 = vunpack.c.l.b16 %v165
    %v234 = vunpack.c.l.b16 %v166
    %v235 = vunpack.c.l.b16 %v167
    %v236 = vunpack.c.l.b16 %v168
    %v237 = vunpack.c.l.b16 %v169
    %v238 = vunpack.c.l.b16 %v170
    %v239 = vunpack.c.l.b16 %v171
    %v240 = vunpack.c.l.b16 %v172
    %v241 = vunpack.c.l.b16 %v173
    %v242 = vunpack.c.l.b16 %v174
    %v243 = vpack.c.b16 %v212, %v211
    %v244 = vpack.c.b16 %v214, %v213
    %v245 = vpack.c.b16 %v216, %v215
    %v246 = vpack.c.b16 %v218, %v217
    %v247 = vpack.c.b16 %v220, %v219
    %v248 = vpack.c.b16 %v222, %v221
    %v249 = vpack.c.b16 %v224, %v223
    %v250 = vpack.c.b16 %v226, %v225
    %v251 = vpack.c.b16 %v228, %v227
    %v252 = vpack.c.b16 %v230, %v229
    %v253 = vpack.c.b16 %v232, %v231
    %v254 = vpack.c.b16 %v234, %v233
    %v255 = vpack.c.b16 %v236, %v235
    %v256 = vpack.c.b16 %v238, %v237
    %v257 = vpack.c.b16 %v240, %v239
    %v258 = vpack.c.b16 %v242, %v241
    %275 = vmatpush.bf16.msra.mxu0 %v250
    %276 = vmatpush.bf16.msra.mxu0 %v249
    %277 = vmatpush.bf16.msra.mxu0 %v248
    %278 = vmatpush.bf16.msra.mxu0 %v247
    %279 = vmatpush.bf16.msra.mxu0 %v246
    %280 = vmatpush.bf16.msra.mxu0 %v245
    %281 = vmatpush.bf16.msra.mxu0 %v244
    %282 = vmatpush.bf16.msra.mxu0 %v243
    %283 = vmatmul.bf16.gmra.mxu0 %v141
    %v284 = vpop.f32.mrf.mxu0
    %v285 = vadd.f32 %v177, %v284
    %v286 = vpop.f32.mrf.mxu0
    %287 = vdwg.mxu0
    %288 = vmatpush.bf16.msra.mxu0 %v258
    %289 = vmatpush.bf16.msra.mxu0 %v257
    %290 = vmatpush.bf16.msra.mxu0 %v256
    %291 = vmatpush.bf16.msra.mxu0 %v255
    %292 = vmatpush.bf16.msra.mxu0 %v254
    %293 = vmatpush.bf16.msra.mxu0 %v253
    %294 = vmatpush.bf16.msra.mxu0 %v252
    %295 = vmatpush.bf16.msra.mxu0 %v251
    %296 = vmatmul.bf16.gmra.mxu0 %v142
    %v297 = vpop.f32.mrf.mxu0
    %v298 = vadd.f32 %v285, %v297
    %v299 = vpop.f32.mrf.mxu0
    %300 = vdwg.mxu0
    %v301 = vpack.c.bf16 %v298, %v298
    %302 = vst [vmem:[#allocation10] sm:$0x3] %v301
    // Predicated region
    $region38: #{tpu_custom_call.1} parent=1 // pred_check
      _
    $region39: #{tpu_custom_call.1} parent=1 // pred_check_branch
      %304 = sbr.rel (0) target = $region41
    $region40: #{tpu_custom_call.1} parent=1 // pred_region
      %306 = vsyncadd [#allocation4], 0
      %s308 = sshll.u32 [#allocation10], 4
      %s309 = int_to_ptr.vmem [resolvable:$true] %s308
      %s310 = sshll.u32 %s5, 4
      %s311 = int_to_ptr.hbm [resolvable:$true] %s310
      %313 = dma.vmem_to_hbm [thread:$0]  %s309, 32, %s311, [#allocation4]
    $region41: #{tpu_custom_call.1} parent=1 // pred_fallthru
      _
    // Predicated region
    $region42: #{tpu_custom_call.1} parent=1 // pred_check
      _
    $region43: #{tpu_custom_call.1} parent=1 // pred_check_branch
      %315 = sbr.rel (0) target = $region45
    $region44: #{tpu_custom_call.1} parent=1 // pred_region
      %317 = dma.done [#allocation4], 32
    $region45: #{tpu_custom_call.1} parent=1 // pred_fallthru
      _
    %318 = vsyncpa [#allocation3], 1
    %319 = vsyncpa [#allocation6], 1
    %320 = vsyncpa [#allocation9], 1
    %321 = vsyncpa [#allocation4], 1

</llo_original>
